<compile_context>
chip_gen: v7x
topology: tpu7x:2x2x1
jax: 0.10.0
libtpu: 0.0.40
codegen_flags: <defaults>
</compile_context>

<pallas_src>
import jax
import jax.numpy as jnp
from jax.experimental import pallas as pl
from jax.experimental.pallas import tpu as pltpu

MAX_TM = 512  # upper bound on the batch tile (amortizes ~0.35us per-step overhead)


def _mlp_kernel(*refs):
    """Fused MLP.  refs = (x_ref, w0, b0, w1, b1, ..., wL, bL, o_ref)."""
    x_ref = refs[0]
    o_ref = refs[-1]
    wb = refs[1:-1]
    ws, bs = wb[0::2], wb[1::2]

    x = x_ref[...].astype(jnp.float32)          # (TM, in_dim), in_dim ~ 3
    in_dim = x_ref.shape[1]

    # Layer 0: contraction length is only `in_dim` (3) -> cheaper as broadcast
    # FMAs on the VPU than an MXU matmul with K=3.  Activations stay at the
    # true hidden width (64 lanes), so downstream tanh/MXU work is halved vs
    # padding every feature axis to 128.
    h = bs[0][...]                               # (1, H0) -> broadcast
    for k in range(in_dim):
        h = h + x[:, k:k + 1] * ws[0][k:k + 1, :]
    h = jnp.tanh(h)

    # Hidden + output layers on the MXU (f32 accumulation).
    for i in range(1, len(ws)):
        h = jnp.dot(h, ws[i][...], preferred_element_type=jnp.float32) + bs[i][...]
        if i < len(ws) - 1:
            h = jnp.tanh(h)

    o_ref[...] = h.astype(o_ref.dtype)


def _pick_tile(n):
    """Largest batch tile (multiple of 8, <= MAX_TM) that still yields >=2 grid
    steps when the batch allows it (so both v7x TensorCores get work)."""
    half = -(-n // 2)                      # cdiv(n, 2)
    return min(MAX_TM, max(8, -(-half // 8) * 8))


@jax.jit
def pinn_forward(x, params):
    """x: (N, in_dim) float32.  params: list of (W (fan_in, fan_out), b (1, fan_out))."""
    n, in_dim = x.shape
    out_dim = params[-1][0].shape[1]

    tm = _pick_tile(n)
    n_pad = -(-n // tm) * tm
    x = x.astype(jnp.float32)
    if n_pad != n:
        x = jnp.pad(x, ((0, n_pad - n), (0, 0)))

    flat = []
    for w, b in params:
        flat.extend([w, b])

    # Input: only the real (tm, in_dim) rows; weights/biases: full, grid-invariant
    # (constant index_map -> fetched once, never refetched).
    in_specs = [pl.BlockSpec((tm, in_dim), lambda i: (i, 0))]
    for w, b in params:
        in_specs.append(pl.BlockSpec(w.shape, lambda i: (0, 0)))
        in_specs.append(pl.BlockSpec(b.shape, lambda i: (0, 0)))

    flops = sum(2 * n_pad * w.shape[0] * w.shape[1] for w, _ in params)
    transcendentals = n_pad * sum(w.shape[1] for w, _ in params[:-1])
    bytes_accessed = 4 * (n_pad * in_dim + n_pad * out_dim
                          + sum(w.size + b.size for w, b in params))

    out = pl.pallas_call(
        _mlp_kernel,
        out_shape=jax.ShapeDtypeStruct((n_pad, out_dim), jnp.float32),
        grid_spec=pltpu.PrefetchScalarGridSpec(
            num_scalar_prefetch=0,
            grid=(n_pad // tm,),
            in_specs=in_specs,
            out_specs=pl.BlockSpec((tm, out_dim), lambda i: (i, 0)),
        ),
        compiler_params=pltpu.CompilerParams(
            dimension_semantics=("parallel",)),
        cost_estimate=pl.CostEstimate(
            flops=flops,
            transcendentals=transcendentals,
            bytes_accessed=bytes_accessed),
    )(x, *flat)

    return out[:n]


def init_pinn_params(key, layers):
    """Xavier-normal weights (PyTorch init.xavier_normal_), zero biases.

    W is stored as (fan_in, fan_out) so the kernel computes x @ W + b
    (== x @ W_torch.T + b).  No padding is stored in HBM.
    """
    params = []
    for i in range(len(layers) - 1):
        fan_in, fan_out = layers[i], layers[i + 1]
        key, sub = jax.random.split(key)
        std = (2.0 / (fan_in + fan_out)) ** 0.5
        w = std * jax.random.normal(sub, (fan_in, fan_out), jnp.float32)
        b = jnp.zeros((1, fan_out), jnp.float32)
        params.append((w, b))
    return params


def pinn_forward_ref(x, params):
    """Pure-JAX reference identical to the PyTorch forward."""
    h = x.astype(jnp.float32)
    for i, (w, b) in enumerate(params):
        h = jnp.dot(h, w, precision=jax.lax.Precision.HIGHEST) + b[0]
        if i < len(params) - 1:
            h = jnp.tanh(h)
    return h


if __name__ == "__main__":
    layers = [3, 64, 64, 64, 2]   # 3D PINN: (x, y, z) in -> 2 state outputs
    batch = 256

    key = jax.random.PRNGKey(0)
    key, kx = jax.random.split(key)
    x = jax.random.uniform(kx, (batch, layers[0]), jnp.float32, minval=-1.0, maxval=1.0)

    params = init_pinn_params(jax.random.PRNGKey(0), layers)

    y = jax.block_until_ready(pinn_forward(x, params))
    y_ref = pinn_forward_ref(x, params)

    assert y.shape == (batch, layers[-1]), y.shape
    assert jnp.allclose(y, y_ref, atol=1e-5, rtol=1e-5), float(jnp.max(jnp.abs(y - y_ref)))

    print("KERNEL_OK")
</pallas_src>

<mosaic_0001>
module attributes {stable_mosaic.version = 11 : i64} {
  func.func @_mlp_kernel(%arg0: i32, %arg1: memref<128x3xf32, #tpu.memory_space<vmem>>, %arg2: memref<3x64xf32, #tpu.memory_space<vmem>>, %arg3: memref<1x64xf32, #tpu.memory_space<vmem>>, %arg4: memref<64x64xf32, #tpu.memory_space<vmem>>, %arg5: memref<1x64xf32, #tpu.memory_space<vmem>>, %arg6: memref<64x64xf32, #tpu.memory_space<vmem>>, %arg7: memref<1x64xf32, #tpu.memory_space<vmem>>, %arg8: memref<64x2xf32, #tpu.memory_space<vmem>>, %arg9: memref<1x2xf32, #tpu.memory_space<vmem>>, %arg10: memref<128x2xf32, #tpu.memory_space<vmem>>) attributes {dimension_semantics = [#tpu.dimension_semantics<parallel>], iteration_bounds = array<i64: 2>, scalar_prefetch = 0 : i64, scratch_operands = 0 : i64, tpu.core_type = #tpu.core_type<tc>, window_params = [{transform_indices = @transform_0, window_bounds = array<i64: 128, 3>}, {pipeline_mode = #tpu.pipeline_mode<synchronous>, transform_indices = @transform_1, window_bounds = array<i64: 3, 64>}, {pipeline_mode = #tpu.pipeline_mode<synchronous>, transform_indices = @transform_2, window_bounds = array<i64: 1, 64>}, {pipeline_mode = #tpu.pipeline_mode<synchronous>, transform_indices = @transform_3, window_bounds = array<i64: 64, 64>}, {pipeline_mode = #tpu.pipeline_mode<synchronous>, transform_indices = @transform_4, window_bounds = array<i64: 1, 64>}, {pipeline_mode = #tpu.pipeline_mode<synchronous>, transform_indices = @transform_5, window_bounds = array<i64: 64, 64>}, {pipeline_mode = #tpu.pipeline_mode<synchronous>, transform_indices = @transform_6, window_bounds = array<i64: 1, 64>}, {pipeline_mode = #tpu.pipeline_mode<synchronous>, transform_indices = @transform_7, window_bounds = array<i64: 64, 2>}, {pipeline_mode = #tpu.pipeline_mode<synchronous>, transform_indices = @transform_8, window_bounds = array<i64: 1, 2>}, {transform_indices = @transform_9, window_bounds = array<i64: 128, 2>}]} {
    %c0 = arith.constant 0 : index
    %c0_0 = arith.constant 0 : index
    %0 = vector.load %arg1[%c0, %c0_0] : memref<128x3xf32, #tpu.memory_space<vmem>>, vector<128x3xf32>
    %c0_1 = arith.constant 0 : index
    %c0_2 = arith.constant 0 : index
    %1 = vector.load %arg3[%c0_1, %c0_2] : memref<1x64xf32, #tpu.memory_space<vmem>>, vector<1x64xf32>
    %2 = vector.extract_strided_slice %0 {offsets = [0, 0], sizes = [128, 1], strides = [1, 1]} : vector<128x3xf32> to vector<128x1xf32>
    %c0_3 = arith.constant 0 : index
    %c0_4 = arith.constant 0 : index
    %3 = vector.load %arg2[%c0_3, %c0_4] : memref<3x64xf32, #tpu.memory_space<vmem>>, vector<1x64xf32>
    %4 = vector.broadcast %2 : vector<128x1xf32> to vector<128x64xf32>
    %5 = vector.broadcast %3 : vector<1x64xf32> to vector<128x64xf32>
    %6 = arith.mulf %4, %5 : vector<128x64xf32>
    %7 = vector.broadcast %1 : vector<1x64xf32> to vector<128x64xf32>
    %8 = arith.addf %7, %6 : vector<128x64xf32>
    %9 = vector.extract_strided_slice %0 {offsets = [0, 1], sizes = [128, 1], strides = [1, 1]} : vector<128x3xf32> to vector<128x1xf32>
    %c1 = arith.constant 1 : index
    %c0_5 = arith.constant 0 : index
    %10 = vector.load %arg2[%c1, %c0_5] : memref<3x64xf32, #tpu.memory_space<vmem>>, vector<1x64xf32>
    %11 = vector.broadcast %9 : vector<128x1xf32> to vector<128x64xf32>
    %12 = vector.broadcast %10 : vector<1x64xf32> to vector<128x64xf32>
    %13 = arith.mulf %11, %12 : vector<128x64xf32>
    %14 = arith.addf %8, %13 : vector<128x64xf32>
    %15 = vector.extract_strided_slice %0 {offsets = [0, 2], sizes = [128, 1], strides = [1, 1]} : vector<128x3xf32> to vector<128x1xf32>
    %c2 = arith.constant 2 : index
    %c0_6 = arith.constant 0 : index
    %16 = vector.load %arg2[%c2, %c0_6] : memref<3x64xf32, #tpu.memory_space<vmem>>, vector<1x64xf32>
    %17 = vector.broadcast %15 : vector<128x1xf32> to vector<128x64xf32>
    %18 = vector.broadcast %16 : vector<1x64xf32> to vector<128x64xf32>
    %19 = arith.mulf %17, %18 : vector<128x64xf32>
    %20 = arith.addf %14, %19 : vector<128x64xf32>
    %21 = math.tanh %20 : vector<128x64xf32>
    %c0_7 = arith.constant 0 : index
    %c0_8 = arith.constant 0 : index
    %22 = vector.load %arg4[%c0_7, %c0_8] : memref<64x64xf32, #tpu.memory_space<vmem>>, vector<64x64xf32>
    %cst = arith.constant dense<0.000000e+00> : vector<128x64xf32>
    %23 = tpu.matmul %21, %22, %cst {dimension_numbers = #tpu.dot_dimension_numbers<[1], [0], [0], [1], [0, 0, 1, 1], [], []>} : vector<128x64xf32>, vector<64x64xf32>, vector<128x64xf32> -> vector<128x64xf32>
    %c0_9 = arith.constant 0 : index
    %c0_10 = arith.constant 0 : index
    %24 = vector.load %arg5[%c0_9, %c0_10] : memref<1x64xf32, #tpu.memory_space<vmem>>, vector<1x64xf32>
    %25 = vector.broadcast %24 : vector<1x64xf32> to vector<128x64xf32>
    %26 = arith.addf %23, %25 : vector<128x64xf32>
    %27 = math.tanh %26 : vector<128x64xf32>
    %c0_11 = arith.constant 0 : index
    %c0_12 = arith.constant 0 : index
    %28 = vector.load %arg6[%c0_11, %c0_12] : memref<64x64xf32, #tpu.memory_space<vmem>>, vector<64x64xf32>
    %cst_13 = arith.constant dense<0.000000e+00> : vector<128x64xf32>
    %29 = tpu.matmul %27, %28, %cst_13 {dimension_numbers = #tpu.dot_dimension_numbers<[1], [0], [0], [1], [0, 0, 1, 1], [], []>} : vector<128x64xf32>, vector<64x64xf32>, vector<128x64xf32> -> vector<128x64xf32>
    %c0_14 = arith.constant 0 : index
    %c0_15 = arith.constant 0 : index
    %30 = vector.load %arg7[%c0_14, %c0_15] : memref<1x64xf32, #tpu.memory_space<vmem>>, vector<1x64xf32>
    %31 = vector.broadcast %30 : vector<1x64xf32> to vector<128x64xf32>
    %32 = arith.addf %29, %31 : vector<128x64xf32>
    %33 = math.tanh %32 : vector<128x64xf32>
    %c0_16 = arith.constant 0 : index
    %c0_17 = arith.constant 0 : index
    %34 = vector.load %arg8[%c0_16, %c0_17] : memref<64x2xf32, #tpu.memory_space<vmem>>, vector<64x2xf32>
    %cst_18 = arith.constant dense<0.000000e+00> : vector<128x2xf32>
    %35 = tpu.matmul %33, %34, %cst_18 {dimension_numbers = #tpu.dot_dimension_numbers<[1], [0], [0], [1], [0, 0, 1, 1], [], []>} : vector<128x64xf32>, vector<64x2xf32>, vector<128x2xf32> -> vector<128x2xf32>
    %c0_19 = arith.constant 0 : index
    %c0_20 = arith.constant 0 : index
    %36 = vector.load %arg9[%c0_19, %c0_20] : memref<1x2xf32, #tpu.memory_space<vmem>>, vector<1x2xf32>
    %37 = vector.broadcast %36 : vector<1x2xf32> to vector<128x2xf32>
    %38 = arith.addf %35, %37 : vector<128x2xf32>
    %c0_21 = arith.constant 0 : index
    %c0_22 = arith.constant 0 : index
    %39 = vector.load %arg10[%c0_21, %c0_22] : memref<128x2xf32, #tpu.memory_space<vmem>>, vector<128x2xf32>
    tpu.vector_store %arg10[%c0_21, %c0_22], %38 {strides = array<i32>} : memref<128x2xf32, #tpu.memory_space<vmem>>, vector<128x2xf32>,
    return
  }
  func.func @transform_0(%arg0: i32) -> (i32, i32) {
    %c0_i32 = arith.constant 0 : i32
    %c0_i32_0 = arith.constant 0 : i32
    return %arg0, %c0_i32 : i32, i32
  }
  func.func @transform_1(%arg0: i32) -> (i32, i32) {
    %c0_i32 = arith.constant 0 : i32
    %c0_i32_0 = arith.constant 0 : i32
    %c0_i32_1 = arith.constant 0 : i32
    return %c0_i32, %c0_i32_0 : i32, i32
  }
  func.func @transform_2(%arg0: i32) -> (i32, i32) {
    %c0_i32 = arith.constant 0 : i32
    %c0_i32_0 = arith.constant 0 : i32
    %c0_i32_1 = arith.constant 0 : i32
    return %c0_i32, %c0_i32_0 : i32, i32
  }
  func.func @transform_3(%arg0: i32) -> (i32, i32) {
    %c0_i32 = arith.constant 0 : i32
    %c0_i32_0 = arith.constant 0 : i32
    %c0_i32_1 = arith.constant 0 : i32
    return %c0_i32, %c0_i32_0 : i32, i32
  }
  func.func @transform_4(%arg0: i32) -> (i32, i32) {
    %c0_i32 = arith.constant 0 : i32
    %c0_i32_0 = arith.constant 0 : i32
    %c0_i32_1 = arith.constant 0 : i32
    return %c0_i32, %c0_i32_0 : i32, i32
  }
  func.func @transform_5(%arg0: i32) -> (i32, i32) {
    %c0_i32 = arith.constant 0 : i32
    %c0_i32_0 = arith.constant 0 : i32
    %c0_i32_1 = arith.constant 0 : i32
    return %c0_i32, %c0_i32_0 : i32, i32
  }
  func.func @transform_6(%arg0: i32) -> (i32, i32) {
    %c0_i32 = arith.constant 0 : i32
    %c0_i32_0 = arith.constant 0 : i32
    %c0_i32_1 = arith.constant 0 : i32
    return %c0_i32, %c0_i32_0 : i32, i32
  }
  func.func @transform_7(%arg0: i32) -> (i32, i32) {
    %c0_i32 = arith.constant 0 : i32
    %c0_i32_0 = arith.constant 0 : i32
    %c0_i32_1 = arith.constant 0 : i32
    return %c0_i32, %c0_i32_0 : i32, i32
  }
  func.func @transform_8(%arg0: i32) -> (i32, i32) {
    %c0_i32 = arith.constant 0 : i32
    %c0_i32_0 = arith.constant 0 : i32
    %c0_i32_1 = arith.constant 0 : i32
    return %c0_i32, %c0_i32_0 : i32, i32
  }
  func.func @transform_9(%arg0: i32) -> (i32, i32) {
    %c0_i32 = arith.constant 0 : i32
    %c0_i32_0 = arith.constant 0 : i32
    return %arg0, %c0_i32 : i32, i32
  }
}

</mosaic_0001>

<llo_original>
// kernel: pinn_forward.1
$region0: #{pinn_forward.1}
  #allocation0 [shape = 'u32[]', space=smem, size = 0x4, offset = 0x4, fixed_abs, tag = 'smem constant byte address 0x4 - core index']
  #allocation1 [shape = 'u32[144,128]{1,0:T(1,128)}', space=vmem, size = 0x12000, scoped, tag = 'internal scratch']
  %s0 = inlined_call_operand.vmem [shape: f32[256,3], index: 0, kind: input, shape index: {}]
  %s1 = inlined_call_operand.vmem [shape: f32[3,64], index: 1, kind: input, shape index: {}]
  %s2 = inlined_call_operand.vmem [shape: f32[1,64], index: 2, kind: input, shape index: {}]
  %s3 = inlined_call_operand.vmem [shape: f32[64,64], index: 3, kind: input, shape index: {}]
  %s4 = inlined_call_operand.vmem [shape: f32[1,64], index: 4, kind: input, shape index: {}]
  %s5 = inlined_call_operand.vmem [shape: f32[64,64], index: 5, kind: input, shape index: {}]
  %s6 = inlined_call_operand.vmem [shape: f32[1,64], index: 6, kind: input, shape index: {}]
  %s7 = inlined_call_operand.vmem [shape: f32[64,2], index: 7, kind: input, shape index: {}]
  %s8 = inlined_call_operand.vmem [shape: f32[1,2], index: 8, kind: input, shape index: {}]
  %s9 = inlined_call_operand.vmem [shape: f32[256,2], index: 9, kind: output, shape index: {}]
  %s10 = sld [smem:[#allocation0]]
  $region69: #{pinn_forward.1} parent=0
    _
  %s12 = ssub.s32 1, %s10
  %s13 = scalar_select 0, %s12, %s10
  loop: start=0, step=1, limit=4
  $region2: #{pinn_forward.1} parent=0 // loop_pre_header
    _
  $region3: #{pinn_forward.1} parent=0 // loop_header
    %s15 = sphi 0, %s19
    %p16 = scmp.ge.s32.totalorder %s15, 4
    %s25 = sphi 0, %s27
    %s28 = sphi 0, %s25
    %s29 = sphi 0, %s28
    %s45 = sphi 0, %s29
    %s49 = sphi 0, %s49
    %s51 = sphi 0, %s49
    %s52 = sphi 0, %s51
    %s66 = sphi 0, %s52
    %s70 = sphi 0, %s70
    %s72 = sphi 0, %s70
    %s73 = sphi 0, %s72
    %s87 = sphi 0, %s73
    %s91 = sphi 0, %s91
    %s93 = sphi 0, %s91
    %s94 = sphi 0, %s93
    %s108 = sphi 0, %s94
    %s112 = sphi 0, %s112
    %s114 = sphi 0, %s112
    %s115 = sphi 0, %s114
    %s129 = sphi 0, %s115
    %s133 = sphi 0, %s133
    %s135 = sphi 0, %s133
    %s136 = sphi 0, %s135
    %s150 = sphi 0, %s136
    %s154 = sphi 0, %s154
    %s156 = sphi 0, %s154
    %s157 = sphi 0, %s156
    %s171 = sphi 0, %s157
    %s175 = sphi 0, %s175
    %s177 = sphi 0, %s175
    %s178 = sphi 0, %s177
    %s192 = sphi 0, %s178
    %s196 = sphi 0, %s196
    %s198 = sphi 0, %s196
    %s199 = sphi 0, %s198
    %s213 = sphi 0, %s199
    %s219 = sphi 0, %s221
    %s222 = sphi 0, %s219
    %s223 = sphi 0, %s222
    %s239 = sphi 0, %s223
  $region4: #{pinn_forward.1} parent=0 // loop_header_branch
    %18 = sbr.rel (%p16) target = $region8
  $region5: #{pinn_forward.1} parent=0 // loop_body
    %s20 = ssub.s32 %s15, 1
    %s21 = ssub.s32 %s15, 2
    %s22 = sadd.s32 %s15, 1
    %s23 = ssub.s32 %s15, %s22
    %p24 = scmp.eq.s32.totalorder %s23, 0
    %s26 = sadd.s32 %s25, 1
    %s27 = scalar_select %p24, %s25, %s26
    %p30 = pneg %p24
    %p31 = scmp.eq.s32.totalorder %s15, 1
    %p32 = por %p30, %p31
    %p33 = scmp.ne.s32.totalorder %s25, %s28
    %p34 = scmp.eq.s32.totalorder %s15, 0
    %p35 = por %p33, %p34
    %p36 = scmp.ne.s32.totalorder %s25, %s28
    %p37 = scmp.eq.s32.totalorder %s20, 1
    %p38 = por %p36, %p37
    %p39 = scmp.ne.s32.totalorder %s28, %s29
    %p40 = scmp.eq.s32.totalorder %s20, 0
    %p41 = por %p39, %p40
    %p42 = scmp.ne.s32.totalorder %s28, %s29
    %p43 = scmp.eq.s32.totalorder %s21, 1
    %p44 = por %p42, %p43
    %p46 = scmp.ne.s32.totalorder %s29, %s45
    %p47 = scmp.eq.s32.totalorder %s21, 0
    %p48 = por %p46, %p47
    %s50 = sadd.s32 %s49, 1
    %p53 = scmp.eq.s32.totalorder %s15, 1
    %p54 = scmp.ne.s32.totalorder %s49, %s51
    %p55 = scmp.eq.s32.totalorder %s15, 0
    %p56 = por %p54, %p55
    %p57 = scmp.ne.s32.totalorder %s49, %s51
    %p58 = scmp.eq.s32.totalorder %s20, 1
    %p59 = por %p57, %p58
    %p60 = scmp.ne.s32.totalorder %s51, %s52
    %p61 = scmp.eq.s32.totalorder %s20, 0
    %p62 = por %p60, %p61
    %p63 = scmp.ne.s32.totalorder %s51, %s52
    %p64 = scmp.eq.s32.totalorder %s21, 1
    %p65 = por %p63, %p64
    %p67 = scmp.ne.s32.totalorder %s52, %s66
    %p68 = scmp.eq.s32.totalorder %s21, 0
    %p69 = por %p67, %p68
    %s71 = sadd.s32 %s70, 1
    %p74 = scmp.eq.s32.totalorder %s15, 1
    %p75 = scmp.ne.s32.totalorder %s70, %s72
    %p76 = scmp.eq.s32.totalorder %s15, 0
    %p77 = por %p75, %p76
    %p78 = scmp.ne.s32.totalorder %s70, %s72
    %p79 = scmp.eq.s32.totalorder %s20, 1
    %p80 = por %p78, %p79
    %p81 = scmp.ne.s32.totalorder %s72, %s73
    %p82 = scmp.eq.s32.totalorder %s20, 0
    %p83 = por %p81, %p82
    %p84 = scmp.ne.s32.totalorder %s72, %s73
    %p85 = scmp.eq.s32.totalorder %s21, 1
    %p86 = por %p84, %p85
    %p88 = scmp.ne.s32.totalorder %s73, %s87
    %p89 = scmp.eq.s32.totalorder %s21, 0
    %p90 = por %p88, %p89
    %s92 = sadd.s32 %s91, 1
    %p95 = scmp.eq.s32.totalorder %s15, 1
    %p96 = scmp.ne.s32.totalorder %s91, %s93
    %p97 = scmp.eq.s32.totalorder %s15, 0
    %p98 = por %p96, %p97
    %p99 = scmp.ne.s32.totalorder %s91, %s93
    %p100 = scmp.eq.s32.totalorder %s20, 1
    %p101 = por %p99, %p100
    %p102 = scmp.ne.s32.totalorder %s93, %s94
    %p103 = scmp.eq.s32.totalorder %s20, 0
    %p104 = por %p102, %p103
    %p105 = scmp.ne.s32.totalorder %s93, %s94
    %p106 = scmp.eq.s32.totalorder %s21, 1
    %p107 = por %p105, %p106
    %p109 = scmp.ne.s32.totalorder %s94, %s108
    %p110 = scmp.eq.s32.totalorder %s21, 0
    %p111 = por %p109, %p110
    %s113 = sadd.s32 %s112, 1
    %p116 = scmp.eq.s32.totalorder %s15, 1
    %p117 = scmp.ne.s32.totalorder %s112, %s114
    %p118 = scmp.eq.s32.totalorder %s15, 0
    %p119 = por %p117, %p118
    %p120 = scmp.ne.s32.totalorder %s112, %s114
    %p121 = scmp.eq.s32.totalorder %s20, 1
    %p122 = por %p120, %p121
    %p123 = scmp.ne.s32.totalorder %s114, %s115
    %p124 = scmp.eq.s32.totalorder %s20, 0
    %p125 = por %p123, %p124
    %p126 = scmp.ne.s32.totalorder %s114, %s115
    %p127 = scmp.eq.s32.totalorder %s21, 1
    %p128 = por %p126, %p127
    %p130 = scmp.ne.s32.totalorder %s115, %s129
    %p131 = scmp.eq.s32.totalorder %s21, 0
    %p132 = por %p130, %p131
    %s134 = sadd.s32 %s133, 1
    %p137 = scmp.eq.s32.totalorder %s15, 1
    %p138 = scmp.ne.s32.totalorder %s133, %s135
    %p139 = scmp.eq.s32.totalorder %s15, 0
    %p140 = por %p138, %p139
    %p141 = scmp.ne.s32.totalorder %s133, %s135
    %p142 = scmp.eq.s32.totalorder %s20, 1
    %p143 = por %p141, %p142
    %p144 = scmp.ne.s32.totalorder %s135, %s136
    %p145 = scmp.eq.s32.totalorder %s20, 0
    %p146 = por %p144, %p145
    %p147 = scmp.ne.s32.totalorder %s135, %s136
    %p148 = scmp.eq.s32.totalorder %s21, 1
    %p149 = por %p147, %p148
    %p151 = scmp.ne.s32.totalorder %s136, %s150
    %p152 = scmp.eq.s32.totalorder %s21, 0
    %p153 = por %p151, %p152
    %s155 = sadd.s32 %s154, 1
    %p158 = scmp.eq.s32.totalorder %s15, 1
    %p159 = scmp.ne.s32.totalorder %s154, %s156
    %p160 = scmp.eq.s32.totalorder %s15, 0
    %p161 = por %p159, %p160
    %p162 = scmp.ne.s32.totalorder %s154, %s156
    %p163 = scmp.eq.s32.totalorder %s20, 1
    %p164 = por %p162, %p163
    %p165 = scmp.ne.s32.totalorder %s156, %s157
    %p166 = scmp.eq.s32.totalorder %s20, 0
    %p167 = por %p165, %p166
    %p168 = scmp.ne.s32.totalorder %s156, %s157
    %p169 = scmp.eq.s32.totalorder %s21, 1
    %p170 = por %p168, %p169
    %p172 = scmp.ne.s32.totalorder %s157, %s171
    %p173 = scmp.eq.s32.totalorder %s21, 0
    %p174 = por %p172, %p173
    %s176 = sadd.s32 %s175, 1
    %p179 = scmp.eq.s32.totalorder %s15, 1
    %p180 = scmp.ne.s32.totalorder %s175, %s177
    %p181 = scmp.eq.s32.totalorder %s15, 0
    %p182 = por %p180, %p181
    %p183 = scmp.ne.s32.totalorder %s175, %s177
    %p184 = scmp.eq.s32.totalorder %s20, 1
    %p185 = por %p183, %p184
    %p186 = scmp.ne.s32.totalorder %s177, %s178
    %p187 = scmp.eq.s32.totalorder %s20, 0
    %p188 = por %p186, %p187
    %p189 = scmp.ne.s32.totalorder %s177, %s178
    %p190 = scmp.eq.s32.totalorder %s21, 1
    %p191 = por %p189, %p190
    %p193 = scmp.ne.s32.totalorder %s178, %s192
    %p194 = scmp.eq.s32.totalorder %s21, 0
    %p195 = por %p193, %p194
    %s197 = sadd.s32 %s196, 1
    %p200 = scmp.eq.s32.totalorder %s15, 1
    %p201 = scmp.ne.s32.totalorder %s196, %s198
    %p202 = scmp.eq.s32.totalorder %s15, 0
    %p203 = por %p201, %p202
    %p204 = scmp.ne.s32.totalorder %s196, %s198
    %p205 = scmp.eq.s32.totalorder %s20, 1
    %p206 = por %p204, %p205
    %p207 = scmp.ne.s32.totalorder %s198, %s199
    %p208 = scmp.eq.s32.totalorder %s20, 0
    %p209 = por %p207, %p208
    %p210 = scmp.ne.s32.totalorder %s198, %s199
    %p211 = scmp.eq.s32.totalorder %s21, 1
    %p212 = por %p210, %p211
    %p214 = scmp.ne.s32.totalorder %s199, %s213
    %p215 = scmp.eq.s32.totalorder %s21, 0
    %p216 = por %p214, %p215
    %s217 = ssub.s32 %s15, %s22
    %p218 = scmp.eq.s32.totalorder %s217, 0
    %s220 = sadd.s32 %s219, 1
    %s221 = scalar_select %p218, %s219, %s220
    %p224 = pneg %p218
    %p225 = scmp.eq.s32.totalorder %s15, 1
    %p226 = por %p224, %p225
    %p227 = scmp.ne.s32.totalorder %s219, %s222
    %p228 = scmp.eq.s32.totalorder %s15, 0
    %p229 = por %p227, %p228
    %p230 = scmp.ne.s32.totalorder %s219, %s222
    %p231 = scmp.eq.s32.totalorder %s20, 1
    %p232 = por %p230, %p231
    %p233 = scmp.ne.s32.totalorder %s222, %s223
    %p234 = scmp.eq.s32.totalorder %s20, 0
    %p235 = por %p233, %p234
    %p236 = scmp.ne.s32.totalorder %s222, %s223
    %p237 = scmp.eq.s32.totalorder %s21, 1
    %p238 = por %p236, %p237
    %p240 = scmp.ne.s32.totalorder %s223, %s239
    %p241 = scmp.eq.s32.totalorder %s21, 0
    %p242 = por %p240, %p241
    %p243 = scmp.le.s32.totalorder 1, %s15
    %p244 = scmp.lt.s32.totalorder %s15, 3
    %p245 = pnand %p243, %p244
    %p246 = pneg %p245
    // Predicated region
    $region9: #{pinn_forward.1} parent=5 // pred_check
      _
    $region10: #{pinn_forward.1} parent=5 // pred_check_branch
      %248 = sbr.rel (%p245) target = $region12
    $region11: #{pinn_forward.1} parent=5 // pred_region
      %s249 = ssub.s32 %s15, 1
      // Predicated region
      $region13: #{pinn_forward.1} parent=11 // pred_check
        %p250 = pneg %p62
      $region14: #{pinn_forward.1} parent=11 // pred_check_branch
        %252 = sbr.rel (%p250) target = $region16
      $region15: #{pinn_forward.1} parent=11 // pred_region
        _
      $region16: #{pinn_forward.1} parent=11 // pred_fallthru
        _
      // Predicated region
      $region17: #{pinn_forward.1} parent=11 // pred_check
        %p253 = pneg %p83
      $region18: #{pinn_forward.1} parent=11 // pred_check_branch
        %255 = sbr.rel (%p253) target = $region20
      $region19: #{pinn_forward.1} parent=11 // pred_region
        _
      $region20: #{pinn_forward.1} parent=11 // pred_fallthru
        _
      // Predicated region
      $region21: #{pinn_forward.1} parent=11 // pred_check
        %p256 = pneg %p104
      $region22: #{pinn_forward.1} parent=11 // pred_check_branch
        %258 = sbr.rel (%p256) target = $region24
      $region23: #{pinn_forward.1} parent=11 // pred_region
        _
      $region24: #{pinn_forward.1} parent=11 // pred_fallthru
        _
      // Predicated region
      $region25: #{pinn_forward.1} parent=11 // pred_check
        %p259 = pneg %p125
      $region26: #{pinn_forward.1} parent=11 // pred_check_branch
        %261 = sbr.rel (%p259) target = $region28
      $region27: #{pinn_forward.1} parent=11 // pred_region
        _
      $region28: #{pinn_forward.1} parent=11 // pred_fallthru
        _
      // Predicated region
      $region29: #{pinn_forward.1} parent=11 // pred_check
        %p262 = pneg %p146
      $region30: #{pinn_forward.1} parent=11 // pred_check_branch
        %264 = sbr.rel (%p262) target = $region32
      $region31: #{pinn_forward.1} parent=11 // pred_region
        _
      $region32: #{pinn_forward.1} parent=11 // pred_fallthru
        _
      // Predicated region
      $region33: #{pinn_forward.1} parent=11 // pred_check
        %p265 = pneg %p167
      $region34: #{pinn_forward.1} parent=11 // pred_check_branch
        %267 = sbr.rel (%p265) target = $region36
      $region35: #{pinn_forward.1} parent=11 // pred_region
        _
      $region36: #{pinn_forward.1} parent=11 // pred_fallthru
        _
      // Predicated region
      $region37: #{pinn_forward.1} parent=11 // pred_check
        %p268 = pneg %p188
      $region38: #{pinn_forward.1} parent=11 // pred_check_branch
        %270 = sbr.rel (%p268) target = $region40
      $region39: #{pinn_forward.1} parent=11 // pred_region
        _
      $region40: #{pinn_forward.1} parent=11 // pred_fallthru
        _
      // Predicated region
      $region41: #{pinn_forward.1} parent=11 // pred_check
        %p271 = pneg %p209
      $region42: #{pinn_forward.1} parent=11 // pred_check_branch
        %273 = sbr.rel (%p271) target = $region44
      $region43: #{pinn_forward.1} parent=11 // pred_region
        _
      $region44: #{pinn_forward.1} parent=11 // pred_fallthru
        _
    $region12: #{pinn_forward.1} parent=5 // pred_fallthru
      _
    %p274 = scmp.lt.s32.totalorder %s15, 2
    // Predicated region
    $region45: #{pinn_forward.1} parent=5 // pred_check
      %p275 = pneg %p274
    $region46: #{pinn_forward.1} parent=5 // pred_check_branch
      %277 = sbr.rel (%p275) target = $region48
    $region47: #{pinn_forward.1} parent=5 // pred_region
      // Predicated region
      $region49: #{pinn_forward.1} parent=47 // pred_check
        %p278 = pneg %p35
      $region50: #{pinn_forward.1} parent=47 // pred_check_branch
        %280 = sbr.rel (%p278) target = $region52
      $region51: #{pinn_forward.1} parent=47 // pred_region
        %s281 = smul.u32 16, %s15
        %p282 = scmp.lt.s32.totalorder %s281, 31
        %s283 = scalar_select %p282, %s281, 31
        %s284 = smul.addr %s283, 8
        %s285 = scalar_lea.vmem %s0, %s284
        %s286 = smul.u32 16, %s15
      $region52: #{pinn_forward.1} parent=47 // pred_fallthru
        _
    $region48: #{pinn_forward.1} parent=5 // pred_fallthru
      _
    %p287 = scmp.le.s32.totalorder 1, %s15
    %p288 = scmp.lt.s32.totalorder %s15, 3
    %p289 = pnand %p287, %p288
    %p290 = pneg %p289
    // Predicated region
    $region53: #{pinn_forward.1} parent=5 // pred_check
      _
    $region54: #{pinn_forward.1} parent=5 // pred_check_branch
      %292 = sbr.rel (%p289) target = $region56
    $region55: #{pinn_forward.1} parent=5 // pred_region
      %s293 = ssub.s32 %s15, 1
      %s294 = smul.u32 16, %s20
      %p295 = scmp.lt.s32.totalorder %s294, 31
      %s296 = scalar_select %p295, %s294, 31
      %s297 = smul.addr %s296, 8
      %s298 = scalar_lea.vmem %s0, %s297
      %p299 = pneg %p41
      %p300 = pneg %p38
      %p301 = pneg %p62
      %p302 = pneg %p59
      %p303 = pneg %p83
      %p304 = pneg %p80
      %p305 = pneg %p104
      %p306 = pneg %p101
      %p307 = pneg %p125
      %p308 = pneg %p122
      %p309 = pneg %p146
      %p310 = pneg %p143
      %p311 = pneg %p167
      %p312 = pneg %p164
      %p313 = pneg %p188
      %p314 = pneg %p185
      %p315 = pneg %p209
      %p316 = pneg %p206
      %p317 = pneg %p235
      %p318 = pneg %p232
      %s319 = smul.u32 16, %s20
      %p320 = scmp.lt.s32.totalorder %s319, 31
      %s321 = scalar_select %p320, %s319, 31
      %s322 = smul.addr %s321, 8
      %s323 = scalar_lea.vmem %s9, %s322
      %s324 = smul.u32 16, %s20
      %p325 = scmp.lt.s32.totalorder %s324, 31
      %s326 = scalar_select %p325, %s324, 31
      %s327 = smul.addr %s326, 8
      %s328 = scalar_lea.vmem %s0, %s327
      %s329 = smul.u32 16, %s20
      %s330 = smul.u32 16, %s20
      %p331 = scmp.lt.s32.totalorder %s330, 31
      %s332 = scalar_select %p331, %s330, 31
      %s333 = smul.addr %s332, 8
      %s334 = scalar_lea.vmem %s9, %s333
      %s335 = smul.u32 16, %s20
      %v336 = vld [vmem:[%s328] sm:$0xff]
      %v337 = vld [vmem:[%s328 + $0x8] sm:$0xff]
      %v338 = vld [vmem:[%s328 + $0x10] sm:$0xff]
      %v339 = vld [vmem:[%s328 + $0x18] sm:$0xff]
      %v340 = vld [vmem:[%s328 + $0x20] sm:$0xff]
      %v341 = vld [vmem:[%s328 + $0x28] sm:$0xff]
      %v342 = vld [vmem:[%s328 + $0x30] sm:$0xff]
      %v343 = vld [vmem:[%s328 + $0x38] sm:$0xff]
      %v344 = vld [vmem:[%s328 + $0x40] sm:$0xff]
      %v345 = vld [vmem:[%s328 + $0x48] sm:$0xff]
      %v346 = vld [vmem:[%s328 + $0x50] sm:$0xff]
      %v347 = vld [vmem:[%s328 + $0x58] sm:$0xff]
      %v348 = vld [vmem:[%s328 + $0x60] sm:$0xff]
      %v349 = vld [vmem:[%s328 + $0x68] sm:$0xff]
      %v350 = vld [vmem:[%s328 + $0x70] sm:$0xff]
      %v351 = vld [vmem:[%s328 + $0x78] sm:$0xff]
      %v352 = vld [vmem:[%s2] sm:$0x1]
      %v353 = vld [vmem:[%s1] sm:$0x1]
      %355 = vset.pattern.permute.xlu0 0
      %356 = vperm.xlu0 %355, %v336
      %v357 = vpop.permute.xlu0 %356
      %360 = vset.pattern.permute.xlu0 0
      %361 = vperm.xlu0 %360, %v337
      %v362 = vpop.permute.xlu0 %361
      %365 = vset.pattern.permute.xlu0 0
      %366 = vperm.xlu0 %365, %v338
      %v367 = vpop.permute.xlu0 %366
      %370 = vset.pattern.permute.xlu0 0
      %371 = vperm.xlu0 %370, %v339
      %v372 = vpop.permute.xlu0 %371
      %375 = vset.pattern.permute.xlu0 0
      %376 = vperm.xlu0 %375, %v340
      %v377 = vpop.permute.xlu0 %376
      %380 = vset.pattern.permute.xlu0 0
      %381 = vperm.xlu0 %380, %v341
      %v382 = vpop.permute.xlu0 %381
      %385 = vset.pattern.permute.xlu0 0
      %386 = vperm.xlu0 %385, %v342
      %v387 = vpop.permute.xlu0 %386
      %390 = vset.pattern.permute.xlu0 0
      %391 = vperm.xlu0 %390, %v343
      %v392 = vpop.permute.xlu0 %391
      %395 = vset.pattern.permute.xlu0 0
      %396 = vperm.xlu0 %395, %v344
      %v397 = vpop.permute.xlu0 %396
      %400 = vset.pattern.permute.xlu0 0
      %401 = vperm.xlu0 %400, %v345
      %v402 = vpop.permute.xlu0 %401
      %405 = vset.pattern.permute.xlu0 0
      %406 = vperm.xlu0 %405, %v346
      %v407 = vpop.permute.xlu0 %406
      %410 = vset.pattern.permute.xlu0 0
      %411 = vperm.xlu0 %410, %v347
      %v412 = vpop.permute.xlu0 %411
      %415 = vset.pattern.permute.xlu0 0
      %416 = vperm.xlu0 %415, %v348
      %v417 = vpop.permute.xlu0 %416
      %420 = vset.pattern.permute.xlu0 0
      %421 = vperm.xlu0 %420, %v349
      %v422 = vpop.permute.xlu0 %421
      %425 = vset.pattern.permute.xlu0 0
      %426 = vperm.xlu0 %425, %v350
      %v427 = vpop.permute.xlu0 %426
      %430 = vset.pattern.permute.xlu0 0
      %431 = vperm.xlu0 %430, %v351
      %v432 = vpop.permute.xlu0 %431
      %v434 = vlaneseq
      %v435 = vshrl.u32 %v434, 7
      %v436 = vsub.s32 0, %v435
      %v437 = vrot.slane %v353, %v436
      %v438 = vmul.f32 %v357, %v437
      %v439 = vmul.f32 %v362, %v437
      %v440 = vmul.f32 %v367, %v437
      %v441 = vmul.f32 %v372, %v437
      %v442 = vmul.f32 %v377, %v437
      %v443 = vmul.f32 %v382, %v437
      %v444 = vmul.f32 %v387, %v437
      %v445 = vmul.f32 %v392, %v437
      %v446 = vmul.f32 %v397, %v437
      %v447 = vmul.f32 %v402, %v437
      %v448 = vmul.f32 %v407, %v437
      %v449 = vmul.f32 %v412, %v437
      %v450 = vmul.f32 %v417, %v437
      %v451 = vmul.f32 %v422, %v437
      %v452 = vmul.f32 %v427, %v437
      %v453 = vmul.f32 %v432, %v437
      %v455 = vlaneseq
      %v456 = vshrl.u32 %v455, 7
      %v457 = vsub.s32 0, %v456
      %v458 = vrot.slane %v352, %v457
      %v460 = vadd.f32 %v458, %v438
      %v461 = vadd.f32 %v458, %v439
      %v462 = vadd.f32 %v458, %v440
      %v463 = vadd.f32 %v458, %v441
      %v464 = vadd.f32 %v458, %v442
      %v465 = vadd.f32 %v458, %v443
      %v466 = vadd.f32 %v458, %v444
      %v467 = vadd.f32 %v458, %v445
      %v468 = vadd.f32 %v458, %v446
      %v469 = vadd.f32 %v458, %v447
      %v470 = vadd.f32 %v458, %v448
      %v471 = vadd.f32 %v458, %v449
      %v472 = vadd.f32 %v458, %v450
      %v473 = vadd.f32 %v458, %v451
      %v474 = vadd.f32 %v458, %v452
      %v475 = vadd.f32 %v458, %v453
      %v476 = vld [vmem:[%s1 + $0x1] sm:$0x1]
      %477 = vset.pattern.permute.xlu0 1
      %478 = vperm.xlu0 %477, %v336
      %v479 = vpop.permute.xlu0 %478
      %481 = vset.pattern.permute.xlu0 1
      %482 = vperm.xlu0 %481, %v337
      %v483 = vpop.permute.xlu0 %482
      %485 = vset.pattern.permute.xlu0 1
      %486 = vperm.xlu0 %485, %v338
      %v487 = vpop.permute.xlu0 %486
      %489 = vset.pattern.permute.xlu0 1
      %490 = vperm.xlu0 %489, %v339
      %v491 = vpop.permute.xlu0 %490
      %493 = vset.pattern.permute.xlu0 1
      %494 = vperm.xlu0 %493, %v340
      %v495 = vpop.permute.xlu0 %494
      %497 = vset.pattern.permute.xlu0 1
      %498 = vperm.xlu0 %497, %v341
      %v499 = vpop.permute.xlu0 %498
      %501 = vset.pattern.permute.xlu0 1
      %502 = vperm.xlu0 %501, %v342
      %v503 = vpop.permute.xlu0 %502
      %505 = vset.pattern.permute.xlu0 1
      %506 = vperm.xlu0 %505, %v343
      %v507 = vpop.permute.xlu0 %506
      %509 = vset.pattern.permute.xlu0 1
      %510 = vperm.xlu0 %509, %v344
      %v511 = vpop.permute.xlu0 %510
      %513 = vset.pattern.permute.xlu0 1
      %514 = vperm.xlu0 %513, %v345
      %v515 = vpop.permute.xlu0 %514
      %517 = vset.pattern.permute.xlu0 1
      %518 = vperm.xlu0 %517, %v346
      %v519 = vpop.permute.xlu0 %518
      %521 = vset.pattern.permute.xlu0 1
      %522 = vperm.xlu0 %521, %v347
      %v523 = vpop.permute.xlu0 %522
      %525 = vset.pattern.permute.xlu0 1
      %526 = vperm.xlu0 %525, %v348
      %v527 = vpop.permute.xlu0 %526
      %529 = vset.pattern.permute.xlu0 1
      %530 = vperm.xlu0 %529, %v349
      %v531 = vpop.permute.xlu0 %530
      %533 = vset.pattern.permute.xlu0 1
      %534 = vperm.xlu0 %533, %v350
      %v535 = vpop.permute.xlu0 %534
      %537 = vset.pattern.permute.xlu0 1
      %538 = vperm.xlu0 %537, %v351
      %v539 = vpop.permute.xlu0 %538
      %v541 = vlaneseq
      %v542 = vshrl.u32 %v541, 7
      %v543 = vsub.s32 0, %v542
      %v544 = vrot.slane %v476, %v543
      %v545 = vmul.f32 %v479, %v544
      %v546 = vmul.f32 %v483, %v544
      %v547 = vmul.f32 %v487, %v544
      %v548 = vmul.f32 %v491, %v544
      %v549 = vmul.f32 %v495, %v544
      %v550 = vmul.f32 %v499, %v544
      %v551 = vmul.f32 %v503, %v544
      %v552 = vmul.f32 %v507, %v544
      %v553 = vmul.f32 %v511, %v544
      %v554 = vmul.f32 %v515, %v544
      %v555 = vmul.f32 %v519, %v544
      %v556 = vmul.f32 %v523, %v544
      %v557 = vmul.f32 %v527, %v544
      %v558 = vmul.f32 %v531, %v544
      %v559 = vmul.f32 %v535, %v544
      %v560 = vmul.f32 %v539, %v544
      %v561 = vadd.f32 %v460, %v545
      %v562 = vadd.f32 %v461, %v546
      %v563 = vadd.f32 %v462, %v547
      %v564 = vadd.f32 %v463, %v548
      %v565 = vadd.f32 %v464, %v549
      %v566 = vadd.f32 %v465, %v550
      %v567 = vadd.f32 %v466, %v551
      %v568 = vadd.f32 %v467, %v552
      %v569 = vadd.f32 %v468, %v553
      %v570 = vadd.f32 %v469, %v554
      %v571 = vadd.f32 %v470, %v555
      %v572 = vadd.f32 %v471, %v556
      %v573 = vadd.f32 %v472, %v557
      %v574 = vadd.f32 %v473, %v558
      %v575 = vadd.f32 %v474, %v559
      %v576 = vadd.f32 %v475, %v560
      %v577 = vld [vmem:[%s1 + $0x2] sm:$0x1]
      %578 = vset.pattern.permute.xlu0 2
      %579 = vperm.xlu0 %578, %v336
      %v580 = vpop.permute.xlu0 %579
      %582 = vset.pattern.permute.xlu0 2
      %583 = vperm.xlu0 %582, %v337
      %v584 = vpop.permute.xlu0 %583
      %586 = vset.pattern.permute.xlu0 2
      %587 = vperm.xlu0 %586, %v338
      %v588 = vpop.permute.xlu0 %587
      %590 = vset.pattern.permute.xlu0 2
      %591 = vperm.xlu0 %590, %v339
      %v592 = vpop.permute.xlu0 %591
      %594 = vset.pattern.permute.xlu0 2
      %595 = vperm.xlu0 %594, %v340
      %v596 = vpop.permute.xlu0 %595
      %598 = vset.pattern.permute.xlu0 2
      %599 = vperm.xlu0 %598, %v341
      %v600 = vpop.permute.xlu0 %599
      %602 = vset.pattern.permute.xlu0 2
      %603 = vperm.xlu0 %602, %v342
      %v604 = vpop.permute.xlu0 %603
      %606 = vset.pattern.permute.xlu0 2
      %607 = vperm.xlu0 %606, %v343
      %v608 = vpop.permute.xlu0 %607
      %610 = vset.pattern.permute.xlu0 2
      %611 = vperm.xlu0 %610, %v344
      %v612 = vpop.permute.xlu0 %611
      %614 = vset.pattern.permute.xlu0 2
      %615 = vperm.xlu0 %614, %v345
      %v616 = vpop.permute.xlu0 %615
      %618 = vset.pattern.permute.xlu0 2
      %619 = vperm.xlu0 %618, %v346
      %v620 = vpop.permute.xlu0 %619
      %622 = vset.pattern.permute.xlu0 2
      %623 = vperm.xlu0 %622, %v347
      %v624 = vpop.permute.xlu0 %623
      %626 = vset.pattern.permute.xlu0 2
      %627 = vperm.xlu0 %626, %v348
      %v628 = vpop.permute.xlu0 %627
      %630 = vset.pattern.permute.xlu0 2
      %631 = vperm.xlu0 %630, %v349
      %v632 = vpop.permute.xlu0 %631
      %634 = vset.pattern.permute.xlu0 2
      %635 = vperm.xlu0 %634, %v350
      %v636 = vpop.permute.xlu0 %635
      %638 = vset.pattern.permute.xlu0 2
      %639 = vperm.xlu0 %638, %v351
      %v640 = vpop.permute.xlu0 %639
      %v642 = vlaneseq
      %v643 = vshrl.u32 %v642, 7
      %v644 = vsub.s32 0, %v643
      %v645 = vrot.slane %v577, %v644
      %v646 = vmul.f32 %v580, %v645
      %v647 = vmul.f32 %v584, %v645
      %v648 = vmul.f32 %v588, %v645
      %v649 = vmul.f32 %v592, %v645
      %v650 = vmul.f32 %v596, %v645
      %v651 = vmul.f32 %v600, %v645
      %v652 = vmul.f32 %v604, %v645
      %v653 = vmul.f32 %v608, %v645
      %v654 = vmul.f32 %v612, %v645
      %v655 = vmul.f32 %v616, %v645
      %v656 = vmul.f32 %v620, %v645
      %v657 = vmul.f32 %v624, %v645
      %v658 = vmul.f32 %v628, %v645
      %v659 = vmul.f32 %v632, %v645
      %v660 = vmul.f32 %v636, %v645
      %v661 = vmul.f32 %v640, %v645
      %v662 = vadd.f32 %v561, %v646
      %v663 = vadd.f32 %v562, %v647
      %v664 = vadd.f32 %v563, %v648
      %v665 = vadd.f32 %v564, %v649
      %v666 = vadd.f32 %v565, %v650
      %v667 = vadd.f32 %v566, %v651
      %v668 = vadd.f32 %v567, %v652
      %v669 = vadd.f32 %v568, %v653
      %v670 = vadd.f32 %v569, %v654
      %v671 = vadd.f32 %v570, %v655
      %v672 = vadd.f32 %v571, %v656
      %v673 = vadd.f32 %v572, %v657
      %v674 = vadd.f32 %v573, %v658
      %v675 = vadd.f32 %v574, %v659
      %v676 = vadd.f32 %v575, %v660
      %v677 = vadd.f32 %v576, %v661
      %v678 = vtanh.pop %v662
      %v679 = vtanh.pop %v663
      %v680 = vtanh.pop %v664
      %v681 = vtanh.pop %v665
      %v682 = vtanh.pop %v666
      %v683 = vtanh.pop %v667
      %v684 = vtanh.pop %v668
      %v685 = vtanh.pop %v669
      %v686 = vtanh.pop %v670
      %v687 = vtanh.pop %v671
      %v688 = vtanh.pop %v672
      %v689 = vtanh.pop %v673
      %v690 = vtanh.pop %v674
      %v691 = vtanh.pop %v675
      %v692 = vtanh.pop %v676
      %v693 = vtanh.pop %v677
      %v694 = vld [vmem:[%s3] sm:$0xff]
      %v695 = vld [vmem:[%s3 + $0x8] sm:$0xff]
      %v696 = vld [vmem:[%s3 + $0x10] sm:$0xff]
      %v697 = vld [vmem:[%s3 + $0x18] sm:$0xff]
      %v698 = vld [vmem:[%s3 + $0x20] sm:$0xff]
      %v699 = vld [vmem:[%s3 + $0x28] sm:$0xff]
      %v700 = vld [vmem:[%s3 + $0x30] sm:$0xff]
      %v701 = vld [vmem:[%s3 + $0x38] sm:$0xff]
      %v702 = vld [vmem:[%s4] sm:$0x1]
      %v704 = vlaneseq
      %v705 = vshrl.u32 %v704, 7
      %v706 = vsub.s32 0, %v705
      %v707 = vrot.slane %v702, %v706
      %vm709 = vcmask 523264
      %v711 = vsel %vm709, %v678, 0
      %v714 = vsel %vm709, %v679, 0
      %v717 = vsel %vm709, %v680, 0
      %v720 = vsel %vm709, %v681, 0
      %v723 = vsel %vm709, %v682, 0
      %v726 = vsel %vm709, %v683, 0
      %v729 = vsel %vm709, %v684, 0
      %v732 = vsel %vm709, %v685, 0
      %v735 = vsel %vm709, %v686, 0
      %v738 = vsel %vm709, %v687, 0
      %v741 = vsel %vm709, %v688, 0
      %v744 = vsel %vm709, %v689, 0
      %v747 = vsel %vm709, %v690, 0
      %v750 = vsel %vm709, %v691, 0
      %v753 = vsel %vm709, %v692, 0
      %v756 = vsel %vm709, %v693, 0
      %758 = vmatprep.subr.mxu0 0.0
      %759 = vmatpush1.msra.mxu0 %v694
      %760 = vmatprep.subr.mxu0 0.0
      %761 = vmatpush1.msra.mxu0 %v695
      %762 = vmatprep.subr.mxu0 0.0
      %763 = vmatpush1.msra.mxu0 %v696
      %764 = vmatprep.subr.mxu0 0.0
      %765 = vmatpush1.msra.mxu0 %v697
      %766 = vmatprep.subr.mxu0 0.0
      %767 = vmatpush1.msra.mxu0 %v698
      %768 = vmatprep.subr.mxu0 0.0
      %769 = vmatpush1.msra.mxu0 %v699
      %770 = vmatprep.subr.mxu0 0.0
      %771 = vmatpush1.msra.mxu0 %v700
      %772 = vmatprep.subr.mxu0 0.0
      %773 = vmatpush1.msra.mxu0 %v701
      %774 = vmatprep.subr.mxu0 0.0
      %775 = vmatpush1.msra.mxu0 0.0
      %776 = vmatprep.subr.mxu0 0.0
      %777 = vmatpush1.msra.mxu0 0.0
      %778 = vmatprep.subr.mxu0 0.0
      %779 = vmatpush1.msra.mxu0 0.0
      %780 = vmatprep.subr.mxu0 0.0
      %781 = vmatpush1.msra.mxu0 0.0
      %782 = vmatprep.subr.mxu0 0.0
      %783 = vmatpush1.msra.mxu0 0.0
      %784 = vmatprep.subr.mxu0 0.0
      %785 = vmatpush1.msra.mxu0 0.0
      %786 = vmatprep.subr.mxu0 0.0
      %787 = vmatpush1.msra.mxu0 0.0
      %788 = vmatprep.subr.mxu0 0.0
      %789 = vmatpush1.msra.mxu0 0.0
      %790 = vmatprep.subr.mxu0 0.0
      %791 = vmatpush1.msra.mxu0 0.0
      %792 = vmatprep.subr.mxu0 0.0
      %793 = vmatpush1.msra.mxu0 0.0
      %794 = vmatprep.subr.mxu0 0.0
      %795 = vmatpush1.msra.mxu0 0.0
      %796 = vmatprep.subr.mxu0 0.0
      %797 = vmatpush1.msra.mxu0 0.0
      %798 = vmatprep.subr.mxu0 0.0
      %799 = vmatpush1.msra.mxu0 0.0
      %800 = vmatprep.subr.mxu0 0.0
      %801 = vmatpush1.msra.mxu0 0.0
      %802 = vmatprep.subr.mxu0 0.0
      %803 = vmatpush1.msra.mxu0 0.0
      %804 = vmatprep.subr.mxu0 0.0
      %805 = vmatpush1.msra.mxu0 0.0
      %806 = vmatprep.subr.mxu0 0.0
      %807 = vmatpush1.msra.mxu0 0.0
      %808 = vmatprep.subr.mxu0 0.0
      %809 = vmatpush1.msra.mxu0 0.0
      %810 = vmatprep.subr.mxu0 0.0
      %811 = vmatpush1.msra.mxu0 0.0
      %812 = vmatprep.subr.mxu0 0.0
      %813 = vmatpush1.msra.mxu0 0.0
      %814 = vmatprep.subr.mxu0 0.0
      %815 = vmatpush1.msra.mxu0 0.0
      %816 = vmatprep.subr.mxu0 0.0
      %817 = vmatpush1.msra.mxu0 0.0
      %818 = vmatprep.subr.mxu0 0.0
      %819 = vmatpush1.msra.mxu0 0.0
      %820 = vmatprep.subr.mxu0 0.0
      %821 = vmatpush1.msra.mxu0 0.0
      %822 = vmatprep.mubr.f32.mxu0 0.0
      %823 = vmatmul.mubr.f32.gmra.mrb[0].mxu0 %v711
      %v824 = vpop.f32.mrb[0].mxu0
      %v825 = vadd.f32 %v707, %v824
      %v826 = vpop.f32.mrb[0].mxu0
      %827 = vmatprep.mubr.f32.mxu0 0.0
      %828 = vmatmul.mubr.f32.gmra.mrb[0].mxu0 %v714
      %v829 = vpop.f32.mrb[0].mxu0
      %v830 = vadd.f32 %v707, %v829
      %v831 = vpop.f32.mrb[0].mxu0
      %832 = vmatprep.mubr.f32.mxu0 0.0
      %833 = vmatmul.mubr.f32.gmra.mrb[0].mxu0 %v717
      %v834 = vpop.f32.mrb[0].mxu0
      %v835 = vadd.f32 %v707, %v834
      %v836 = vpop.f32.mrb[0].mxu0
      %837 = vmatprep.mubr.f32.mxu0 0.0
      %838 = vmatmul.mubr.f32.gmra.mrb[0].mxu0 %v720
      %v839 = vpop.f32.mrb[0].mxu0
      %v840 = vadd.f32 %v707, %v839
      %v841 = vpop.f32.mrb[0].mxu0
      %842 = vmatprep.mubr.f32.mxu0 0.0
      %843 = vmatmul.mubr.f32.gmra.mrb[0].mxu0 %v723
      %v844 = vpop.f32.mrb[0].mxu0
      %v845 = vadd.f32 %v707, %v844
      %v846 = vpop.f32.mrb[0].mxu0
      %847 = vmatprep.mubr.f32.mxu0 0.0
      %848 = vmatmul.mubr.f32.gmra.mrb[0].mxu0 %v726
      %v849 = vpop.f32.mrb[0].mxu0
      %v850 = vadd.f32 %v707, %v849
      %v851 = vpop.f32.mrb[0].mxu0
      %852 = vmatprep.mubr.f32.mxu0 0.0
      %853 = vmatmul.mubr.f32.gmra.mrb[0].mxu0 %v729
      %v854 = vpop.f32.mrb[0].mxu0
      %v855 = vadd.f32 %v707, %v854
      %v856 = vpop.f32.mrb[0].mxu0
      %857 = vmatprep.mubr.f32.mxu0 0.0
      %858 = vmatmul.mubr.f32.gmra.mrb[0].mxu0 %v732
      %v859 = vpop.f32.mrb[0].mxu0
      %v860 = vadd.f32 %v707, %v859
      %v861 = vpop.f32.mrb[0].mxu0
      %862 = vmatprep.mubr.f32.mxu0 0.0
      %863 = vmatmul.mubr.f32.gmra.mrb[0].mxu0 %v735
      %v864 = vpop.f32.mrb[0].mxu0
      %v865 = vadd.f32 %v707, %v864
      %v866 = vpop.f32.mrb[0].mxu0
      %867 = vmatprep.mubr.f32.mxu0 0.0
      %868 = vmatmul.mubr.f32.gmra.mrb[0].mxu0 %v738
      %v869 = vpop.f32.mrb[0].mxu0
      %v870 = vadd.f32 %v707, %v869
      %v871 = vpop.f32.mrb[0].mxu0
      %872 = vmatprep.mubr.f32.mxu0 0.0
      %873 = vmatmul.mubr.f32.gmra.mrb[0].mxu0 %v741
      %v874 = vpop.f32.mrb[0].mxu0
      %v875 = vadd.f32 %v707, %v874
      %v876 = vpop.f32.mrb[0].mxu0
      %877 = vmatprep.mubr.f32.mxu0 0.0
      %878 = vmatmul.mubr.f32.gmra.mrb[0].mxu0 %v744
      %v879 = vpop.f32.mrb[0].mxu0
      %v880 = vadd.f32 %v707, %v879
      %v881 = vpop.f32.mrb[0].mxu0
      %882 = vmatprep.mubr.f32.mxu0 0.0
      %883 = vmatmul.mubr.f32.gmra.mrb[0].mxu0 %v747
      %v884 = vpop.f32.mrb[0].mxu0
      %v885 = vadd.f32 %v707, %v884
      %v886 = vpop.f32.mrb[0].mxu0
      %887 = vmatprep.mubr.f32.mxu0 0.0
      %888 = vmatmul.mubr.f32.gmra.mrb[0].mxu0 %v750
      %v889 = vpop.f32.mrb[0].mxu0
      %v890 = vadd.f32 %v707, %v889
      %v891 = vpop.f32.mrb[0].mxu0
      %892 = vmatprep.mubr.f32.mxu0 0.0
      %893 = vmatmul.mubr.f32.gmra.mrb[0].mxu0 %v753
      %v894 = vpop.f32.mrb[0].mxu0
      %v895 = vadd.f32 %v707, %v894
      %v896 = vpop.f32.mrb[0].mxu0
      %897 = vmatprep.mubr.f32.mxu0 0.0
      %898 = vmatmul.mubr.f32.gmra.mrb[0].mxu0 %v756
      %v899 = vpop.f32.mrb[0].mxu0
      %v900 = vadd.f32 %v707, %v899
      %v901 = vpop.f32.mrb[0].mxu0
      %902 = vdwg.mxu0
      %v903 = vtanh.pop %v825
      %v904 = vtanh.pop %v830
      %v905 = vtanh.pop %v835
      %v906 = vtanh.pop %v840
      %v907 = vtanh.pop %v845
      %v908 = vtanh.pop %v850
      %v909 = vtanh.pop %v855
      %v910 = vtanh.pop %v860
      %v911 = vtanh.pop %v865
      %v912 = vtanh.pop %v870
      %v913 = vtanh.pop %v875
      %v914 = vtanh.pop %v880
      %v915 = vtanh.pop %v885
      %v916 = vtanh.pop %v890
      %v917 = vtanh.pop %v895
      %v918 = vtanh.pop %v900
      %v919 = vld [vmem:[%s5] sm:$0xff]
      %v920 = vld [vmem:[%s5 + $0x8] sm:$0xff]
      %v921 = vld [vmem:[%s5 + $0x10] sm:$0xff]
      %v922 = vld [vmem:[%s5 + $0x18] sm:$0xff]
      %v923 = vld [vmem:[%s5 + $0x20] sm:$0xff]
      %v924 = vld [vmem:[%s5 + $0x28] sm:$0xff]
      %v925 = vld [vmem:[%s5 + $0x30] sm:$0xff]
      %v926 = vld [vmem:[%s5 + $0x38] sm:$0xff]
      %v927 = vld [vmem:[%s6] sm:$0x1]
      %v929 = vlaneseq
      %v930 = vshrl.u32 %v929, 7
      %v931 = vsub.s32 0, %v930
      %v932 = vrot.slane %v927, %v931
      %v935 = vsel %vm709, %v903, 0
      %v938 = vsel %vm709, %v904, 0
      %v941 = vsel %vm709, %v905, 0
      %v944 = vsel %vm709, %v906, 0
      %v947 = vsel %vm709, %v907, 0
      %v950 = vsel %vm709, %v908, 0
      %v953 = vsel %vm709, %v909, 0
      %v956 = vsel %vm709, %v910, 0
      %v959 = vsel %vm709, %v911, 0
      %v962 = vsel %vm709, %v912, 0
      %v965 = vsel %vm709, %v913, 0
      %v968 = vsel %vm709, %v914, 0
      %v971 = vsel %vm709, %v915, 0
      %v974 = vsel %vm709, %v916, 0
      %v977 = vsel %vm709, %v917, 0
      %v980 = vsel %vm709, %v918, 0
      %982 = vmatprep.subr.mxu0 0.0
      %983 = vmatpush1.msra.mxu0 %v919
      %984 = vmatprep.subr.mxu0 0.0
      %985 = vmatpush1.msra.mxu0 %v920
      %986 = vmatprep.subr.mxu0 0.0
      %987 = vmatpush1.msra.mxu0 %v921
      %988 = vmatprep.subr.mxu0 0.0
      %989 = vmatpush1.msra.mxu0 %v922
      %990 = vmatprep.subr.mxu0 0.0
      %991 = vmatpush1.msra.mxu0 %v923
      %992 = vmatprep.subr.mxu0 0.0
      %993 = vmatpush1.msra.mxu0 %v924
      %994 = vmatprep.subr.mxu0 0.0
      %995 = vmatpush1.msra.mxu0 %v925
      %996 = vmatprep.subr.mxu0 0.0
      %997 = vmatpush1.msra.mxu0 %v926
      %998 = vmatprep.subr.mxu0 0.0
      %999 = vmatpush1.msra.mxu0 0.0
      %1000 = vmatprep.subr.mxu0 0.0
      %1001 = vmatpush1.msra.mxu0 0.0
      %1002 = vmatprep.subr.mxu0 0.0
      %1003 = vmatpush1.msra.mxu0 0.0
      %1004 = vmatprep.subr.mxu0 0.0
      %1005 = vmatpush1.msra.mxu0 0.0
      %1006 = vmatprep.subr.mxu0 0.0
      %1007 = vmatpush1.msra.mxu0 0.0
      %1008 = vmatprep.subr.mxu0 0.0
      %1009 = vmatpush1.msra.mxu0 0.0
      %1010 = vmatprep.subr.mxu0 0.0
      %1011 = vmatpush1.msra.mxu0 0.0
      %1012 = vmatprep.subr.mxu0 0.0
      %1013 = vmatpush1.msra.mxu0 0.0
      %1014 = vmatprep.subr.mxu0 0.0
      %1015 = vmatpush1.msra.mxu0 0.0
      %1016 = vmatprep.subr.mxu0 0.0
      %1017 = vmatpush1.msra.mxu0 0.0
      %1018 = vmatprep.subr.mxu0 0.0
      %1019 = vmatpush1.msra.mxu0 0.0
      %1020 = vmatprep.subr.mxu0 0.0
      %1021 = vmatpush1.msra.mxu0 0.0
      %1022 = vmatprep.subr.mxu0 0.0
      %1023 = vmatpush1.msra.mxu0 0.0
      %1024 = vmatprep.subr.mxu0 0.0
      %1025 = vmatpush1.msra.mxu0 0.0
      %1026 = vmatprep.subr.mxu0 0.0
      %1027 = vmatpush1.msra.mxu0 0.0
      %1028 = vmatprep.subr.mxu0 0.0
      %1029 = vmatpush1.msra.mxu0 0.0
      %1030 = vmatprep.subr.mxu0 0.0
      %1031 = vmatpush1.msra.mxu0 0.0
      %1032 = vmatprep.subr.mxu0 0.0
      %1033 = vmatpush1.msra.mxu0 0.0
      %1034 = vmatprep.subr.mxu0 0.0
      %1035 = vmatpush1.msra.mxu0 0.0
      %1036 = vmatprep.subr.mxu0 0.0
      %1037 = vmatpush1.msra.mxu0 0.0
      %1038 = vmatprep.subr.mxu0 0.0
      %1039 = vmatpush1.msra.mxu0 0.0
      %1040 = vmatprep.subr.mxu0 0.0
      %1041 = vmatpush1.msra.mxu0 0.0
      %1042 = vmatprep.subr.mxu0 0.0
      %1043 = vmatpush1.msra.mxu0 0.0
      %1044 = vmatprep.subr.mxu0 0.0
      %1045 = vmatpush1.msra.mxu0 0.0
      %1046 = vmatprep.mubr.f32.mxu0 0.0
      %1047 = vmatmul.mubr.f32.gmra.mrb[0].mxu0 %v935
      %v1048 = vpop.f32.mrb[0].mxu0
      %v1049 = vadd.f32 %v932, %v1048
      %v1050 = vpop.f32.mrb[0].mxu0
      %1051 = vmatprep.mubr.f32.mxu0 0.0
      %1052 = vmatmul.mubr.f32.gmra.mrb[0].mxu0 %v938
      %v1053 = vpop.f32.mrb[0].mxu0
      %v1054 = vadd.f32 %v932, %v1053
      %v1055 = vpop.f32.mrb[0].mxu0
      %1056 = vmatprep.mubr.f32.mxu0 0.0
      %1057 = vmatmul.mubr.f32.gmra.mrb[0].mxu0 %v941
      %v1058 = vpop.f32.mrb[0].mxu0
      %v1059 = vadd.f32 %v932, %v1058
      %v1060 = vpop.f32.mrb[0].mxu0
      %1061 = vmatprep.mubr.f32.mxu0 0.0
      %1062 = vmatmul.mubr.f32.gmra.mrb[0].mxu0 %v944
      %v1063 = vpop.f32.mrb[0].mxu0
      %v1064 = vadd.f32 %v932, %v1063
      %v1065 = vpop.f32.mrb[0].mxu0
      %1066 = vmatprep.mubr.f32.mxu0 0.0
      %1067 = vmatmul.mubr.f32.gmra.mrb[0].mxu0 %v947
      %v1068 = vpop.f32.mrb[0].mxu0
      %v1069 = vadd.f32 %v932, %v1068
      %v1070 = vpop.f32.mrb[0].mxu0
      %1071 = vmatprep.mubr.f32.mxu0 0.0
      %1072 = vmatmul.mubr.f32.gmra.mrb[0].mxu0 %v950
      %v1073 = vpop.f32.mrb[0].mxu0
      %v1074 = vadd.f32 %v932, %v1073
      %v1075 = vpop.f32.mrb[0].mxu0
      %1076 = vmatprep.mubr.f32.mxu0 0.0
      %1077 = vmatmul.mubr.f32.gmra.mrb[0].mxu0 %v953
      %v1078 = vpop.f32.mrb[0].mxu0
      %v1079 = vadd.f32 %v932, %v1078
      %v1080 = vpop.f32.mrb[0].mxu0
      %1081 = vmatprep.mubr.f32.mxu0 0.0
      %1082 = vmatmul.mubr.f32.gmra.mrb[0].mxu0 %v956
      %v1083 = vpop.f32.mrb[0].mxu0
      %v1084 = vadd.f32 %v932, %v1083
      %v1085 = vpop.f32.mrb[0].mxu0
      %1086 = vmatprep.mubr.f32.mxu0 0.0
      %1087 = vmatmul.mubr.f32.gmra.mrb[0].mxu0 %v959
      %v1088 = vpop.f32.mrb[0].mxu0
      %v1089 = vadd.f32 %v932, %v1088
      %v1090 = vpop.f32.mrb[0].mxu0
      %1091 = vmatprep.mubr.f32.mxu0 0.0
      %1092 = vmatmul.mubr.f32.gmra.mrb[0].mxu0 %v962
      %v1093 = vpop.f32.mrb[0].mxu0
      %v1094 = vadd.f32 %v932, %v1093
      %v1095 = vpop.f32.mrb[0].mxu0
      %1096 = vmatprep.mubr.f32.mxu0 0.0
      %1097 = vmatmul.mubr.f32.gmra.mrb[0].mxu0 %v965
      %v1098 = vpop.f32.mrb[0].mxu0
      %v1099 = vadd.f32 %v932, %v1098
      %v1100 = vpop.f32.mrb[0].mxu0
      %1101 = vmatprep.mubr.f32.mxu0 0.0
      %1102 = vmatmul.mubr.f32.gmra.mrb[0].mxu0 %v968
      %v1103 = vpop.f32.mrb[0].mxu0
      %v1104 = vadd.f32 %v932, %v1103
      %v1105 = vpop.f32.mrb[0].mxu0
      %1106 = vmatprep.mubr.f32.mxu0 0.0
      %1107 = vmatmul.mubr.f32.gmra.mrb[0].mxu0 %v971
      %v1108 = vpop.f32.mrb[0].mxu0
      %v1109 = vadd.f32 %v932, %v1108
      %v1110 = vpop.f32.mrb[0].mxu0
      %1111 = vmatprep.mubr.f32.mxu0 0.0
      %1112 = vmatmul.mubr.f32.gmra.mrb[0].mxu0 %v974
      %v1113 = vpop.f32.mrb[0].mxu0
      %v1114 = vadd.f32 %v932, %v1113
      %v1115 = vpop.f32.mrb[0].mxu0
      %1116 = vmatprep.mubr.f32.mxu0 0.0
      %1117 = vmatmul.mubr.f32.gmra.mrb[0].mxu0 %v977
      %v1118 = vpop.f32.mrb[0].mxu0
      %v1119 = vadd.f32 %v932, %v1118
      %v1120 = vpop.f32.mrb[0].mxu0
      %1121 = vmatprep.mubr.f32.mxu0 0.0
      %1122 = vmatmul.mubr.f32.gmra.mrb[0].mxu0 %v980
      %v1123 = vpop.f32.mrb[0].mxu0
      %v1124 = vadd.f32 %v932, %v1123
      %v1125 = vpop.f32.mrb[0].mxu0
      %1126 = vdwg.mxu0
      %v1127 = vtanh.pop %v1049
      %v1128 = vtanh.pop %v1054
      %v1129 = vtanh.pop %v1059
      %v1130 = vtanh.pop %v1064
      %v1131 = vtanh.pop %v1069
      %v1132 = vtanh.pop %v1074
      %v1133 = vtanh.pop %v1079
      %v1134 = vtanh.pop %v1084
      %v1135 = vtanh.pop %v1089
      %v1136 = vtanh.pop %v1094
      %v1137 = vtanh.pop %v1099
      %v1138 = vtanh.pop %v1104
      %v1139 = vtanh.pop %v1109
      %v1140 = vtanh.pop %v1114
      %v1141 = vtanh.pop %v1119
      %v1142 = vtanh.pop %v1124
      %v1143 = vld [vmem:[%s7] sm:$0xff]
      %v1144 = vld [vmem:[%s7 + $0x8] sm:$0xff]
      %v1145 = vld [vmem:[%s7 + $0x10] sm:$0xff]
      %v1146 = vld [vmem:[%s7 + $0x18] sm:$0xff]
      %v1147 = vld [vmem:[%s7 + $0x20] sm:$0xff]
      %v1148 = vld [vmem:[%s7 + $0x28] sm:$0xff]
      %v1149 = vld [vmem:[%s7 + $0x30] sm:$0xff]
      %v1150 = vld [vmem:[%s7 + $0x38] sm:$0xff]
      %v1151 = vld [vmem:[%s8] sm:$0x1]
      %v1153 = vlaneseq
      %v1154 = vshrl.u32 %v1153, 7
      %v1155 = vsub.s32 0, %v1154
      %v1156 = vrot.slane %v1151, %v1155
      %v1159 = vsel %vm709, %v1127, 0
      %v1162 = vsel %vm709, %v1128, 0
      %v1165 = vsel %vm709, %v1129, 0
      %v1168 = vsel %vm709, %v1130, 0
      %v1171 = vsel %vm709, %v1131, 0
      %v1174 = vsel %vm709, %v1132, 0
      %v1177 = vsel %vm709, %v1133, 0
      %v1180 = vsel %vm709, %v1134, 0
      %v1183 = vsel %vm709, %v1135, 0
      %v1186 = vsel %vm709, %v1136, 0
      %v1189 = vsel %vm709, %v1137, 0
      %v1192 = vsel %vm709, %v1138, 0
      %v1195 = vsel %vm709, %v1139, 0
      %v1198 = vsel %vm709, %v1140, 0
      %v1201 = vsel %vm709, %v1141, 0
      %v1204 = vsel %vm709, %v1142, 0
      %1206 = vmatprep.subr.mxu0 0.0
      %1207 = vmatpush1.msra.mxu0 %v1143
      %1208 = vmatprep.subr.mxu0 0.0
      %1209 = vmatpush1.msra.mxu0 %v1144
      %1210 = vmatprep.subr.mxu0 0.0
      %1211 = vmatpush1.msra.mxu0 %v1145
      %1212 = vmatprep.subr.mxu0 0.0
      %1213 = vmatpush1.msra.mxu0 %v1146
      %1214 = vmatprep.subr.mxu0 0.0
      %1215 = vmatpush1.msra.mxu0 %v1147
      %1216 = vmatprep.subr.mxu0 0.0
      %1217 = vmatpush1.msra.mxu0 %v1148
      %1218 = vmatprep.subr.mxu0 0.0
      %1219 = vmatpush1.msra.mxu0 %v1149
      %1220 = vmatprep.subr.mxu0 0.0
      %1221 = vmatpush1.msra.mxu0 %v1150
      %1222 = vmatprep.subr.mxu0 0.0
      %1223 = vmatpush1.msra.mxu0 0.0
      %1224 = vmatprep.subr.mxu0 0.0
      %1225 = vmatpush1.msra.mxu0 0.0
      %1226 = vmatprep.subr.mxu0 0.0
      %1227 = vmatpush1.msra.mxu0 0.0
      %1228 = vmatprep.subr.mxu0 0.0
      %1229 = vmatpush1.msra.mxu0 0.0
      %1230 = vmatprep.subr.mxu0 0.0
      %1231 = vmatpush1.msra.mxu0 0.0
      %1232 = vmatprep.subr.mxu0 0.0
      %1233 = vmatpush1.msra.mxu0 0.0
      %1234 = vmatprep.subr.mxu0 0.0
      %1235 = vmatpush1.msra.mxu0 0.0
      %1236 = vmatprep.subr.mxu0 0.0
      %1237 = vmatpush1.msra.mxu0 0.0
      %1238 = vmatprep.subr.mxu0 0.0
      %1239 = vmatpush1.msra.mxu0 0.0
      %1240 = vmatprep.subr.mxu0 0.0
      %1241 = vmatpush1.msra.mxu0 0.0
      %1242 = vmatprep.subr.mxu0 0.0
      %1243 = vmatpush1.msra.mxu0 0.0
      %1244 = vmatprep.subr.mxu0 0.0
      %1245 = vmatpush1.msra.mxu0 0.0
      %1246 = vmatprep.subr.mxu0 0.0
      %1247 = vmatpush1.msra.mxu0 0.0
      %1248 = vmatprep.subr.mxu0 0.0
      %1249 = vmatpush1.msra.mxu0 0.0
      %1250 = vmatprep.subr.mxu0 0.0
      %1251 = vmatpush1.msra.mxu0 0.0
      %1252 = vmatprep.subr.mxu0 0.0
      %1253 = vmatpush1.msra.mxu0 0.0
      %1254 = vmatprep.subr.mxu0 0.0
      %1255 = vmatpush1.msra.mxu0 0.0
      %1256 = vmatprep.subr.mxu0 0.0
      %1257 = vmatpush1.msra.mxu0 0.0
      %1258 = vmatprep.subr.mxu0 0.0
      %1259 = vmatpush1.msra.mxu0 0.0
      %1260 = vmatprep.subr.mxu0 0.0
      %1261 = vmatpush1.msra.mxu0 0.0
      %1262 = vmatprep.subr.mxu0 0.0
      %1263 = vmatpush1.msra.mxu0 0.0
      %1264 = vmatprep.subr.mxu0 0.0
      %1265 = vmatpush1.msra.mxu0 0.0
      %1266 = vmatprep.subr.mxu0 0.0
      %1267 = vmatpush1.msra.mxu0 0.0
      %1268 = vmatprep.subr.mxu0 0.0
      %1269 = vmatpush1.msra.mxu0 0.0
      %1270 = vmatprep.mubr.f32.mxu0 0.0
      %1271 = vmatmul.mubr.f32.gmra.mrb[0].mxu0 %v1159
      %v1272 = vpop.f32.mrb[0].mxu0
      %v1273 = vadd.f32 %v1156, %v1272
      %v1274 = vpop.f32.mrb[0].mxu0
      %1275 = vmatprep.mubr.f32.mxu0 0.0
      %1276 = vmatmul.mubr.f32.gmra.mrb[0].mxu0 %v1162
      %v1277 = vpop.f32.mrb[0].mxu0
      %v1278 = vadd.f32 %v1156, %v1277
      %v1279 = vpop.f32.mrb[0].mxu0
      %1280 = vmatprep.mubr.f32.mxu0 0.0
      %1281 = vmatmul.mubr.f32.gmra.mrb[0].mxu0 %v1165
      %v1282 = vpop.f32.mrb[0].mxu0
      %v1283 = vadd.f32 %v1156, %v1282
      %v1284 = vpop.f32.mrb[0].mxu0
      %1285 = vmatprep.mubr.f32.mxu0 0.0
      %1286 = vmatmul.mubr.f32.gmra.mrb[0].mxu0 %v1168
      %v1287 = vpop.f32.mrb[0].mxu0
      %v1288 = vadd.f32 %v1156, %v1287
      %v1289 = vpop.f32.mrb[0].mxu0
      %1290 = vmatprep.mubr.f32.mxu0 0.0
      %1291 = vmatmul.mubr.f32.gmra.mrb[0].mxu0 %v1171
      %v1292 = vpop.f32.mrb[0].mxu0
      %v1293 = vadd.f32 %v1156, %v1292
      %v1294 = vpop.f32.mrb[0].mxu0
      %1295 = vmatprep.mubr.f32.mxu0 0.0
      %1296 = vmatmul.mubr.f32.gmra.mrb[0].mxu0 %v1174
      %v1297 = vpop.f32.mrb[0].mxu0
      %v1298 = vadd.f32 %v1156, %v1297
      %v1299 = vpop.f32.mrb[0].mxu0
      %1300 = vmatprep.mubr.f32.mxu0 0.0
      %1301 = vmatmul.mubr.f32.gmra.mrb[0].mxu0 %v1177
      %v1302 = vpop.f32.mrb[0].mxu0
      %v1303 = vadd.f32 %v1156, %v1302
      %v1304 = vpop.f32.mrb[0].mxu0
      %1305 = vmatprep.mubr.f32.mxu0 0.0
      %1306 = vmatmul.mubr.f32.gmra.mrb[0].mxu0 %v1180
      %v1307 = vpop.f32.mrb[0].mxu0
      %v1308 = vadd.f32 %v1156, %v1307
      %v1309 = vpop.f32.mrb[0].mxu0
      %1310 = vmatprep.mubr.f32.mxu0 0.0
      %1311 = vmatmul.mubr.f32.gmra.mrb[0].mxu0 %v1183
      %v1312 = vpop.f32.mrb[0].mxu0
      %v1313 = vadd.f32 %v1156, %v1312
      %v1314 = vpop.f32.mrb[0].mxu0
      %1315 = vmatprep.mubr.f32.mxu0 0.0
      %1316 = vmatmul.mubr.f32.gmra.mrb[0].mxu0 %v1186
      %v1317 = vpop.f32.mrb[0].mxu0
      %v1318 = vadd.f32 %v1156, %v1317
      %v1319 = vpop.f32.mrb[0].mxu0
      %1320 = vmatprep.mubr.f32.mxu0 0.0
      %1321 = vmatmul.mubr.f32.gmra.mrb[0].mxu0 %v1189
      %v1322 = vpop.f32.mrb[0].mxu0
      %v1323 = vadd.f32 %v1156, %v1322
      %v1324 = vpop.f32.mrb[0].mxu0
      %1325 = vmatprep.mubr.f32.mxu0 0.0
      %1326 = vmatmul.mubr.f32.gmra.mrb[0].mxu0 %v1192
      %v1327 = vpop.f32.mrb[0].mxu0
      %v1328 = vadd.f32 %v1156, %v1327
      %v1329 = vpop.f32.mrb[0].mxu0
      %1330 = vmatprep.mubr.f32.mxu0 0.0
      %1331 = vmatmul.mubr.f32.gmra.mrb[0].mxu0 %v1195
      %v1332 = vpop.f32.mrb[0].mxu0
      %v1333 = vadd.f32 %v1156, %v1332
      %v1334 = vpop.f32.mrb[0].mxu0
      %1335 = vmatprep.mubr.f32.mxu0 0.0
      %1336 = vmatmul.mubr.f32.gmra.mrb[0].mxu0 %v1198
      %v1337 = vpop.f32.mrb[0].mxu0
      %v1338 = vadd.f32 %v1156, %v1337
      %v1339 = vpop.f32.mrb[0].mxu0
      %1340 = vmatprep.mubr.f32.mxu0 0.0
      %1341 = vmatmul.mubr.f32.gmra.mrb[0].mxu0 %v1201
      %v1342 = vpop.f32.mrb[0].mxu0
      %v1343 = vadd.f32 %v1156, %v1342
      %v1344 = vpop.f32.mrb[0].mxu0
      %1345 = vmatprep.mubr.f32.mxu0 0.0
      %1346 = vmatmul.mubr.f32.gmra.mrb[0].mxu0 %v1204
      %v1347 = vpop.f32.mrb[0].mxu0
      %v1348 = vadd.f32 %v1156, %v1347
      %v1349 = vpop.f32.mrb[0].mxu0
      %1350 = vdwg.mxu0
      %vm1351 = vcmask 15360
      %1352 = vst.msk [vmem:[%s334] sm:$0xff] %vm1351, %v1273
      %1353 = vst.msk [vmem:[%s334 + $0x8] sm:$0xff] %vm1351, %v1278
      %1354 = vst.msk [vmem:[%s334 + $0x10] sm:$0xff] %vm1351, %v1283
      %1355 = vst.msk [vmem:[%s334 + $0x18] sm:$0xff] %vm1351, %v1288
      %1356 = vst.msk [vmem:[%s334 + $0x20] sm:$0xff] %vm1351, %v1293
      %1357 = vst.msk [vmem:[%s334 + $0x28] sm:$0xff] %vm1351, %v1298
      %1358 = vst.msk [vmem:[%s334 + $0x30] sm:$0xff] %vm1351, %v1303
      %1359 = vst.msk [vmem:[%s334 + $0x38] sm:$0xff] %vm1351, %v1308
      %1360 = vst.msk [vmem:[%s334 + $0x40] sm:$0xff] %vm1351, %v1313
      %1361 = vst.msk [vmem:[%s334 + $0x48] sm:$0xff] %vm1351, %v1318
      %1362 = vst.msk [vmem:[%s334 + $0x50] sm:$0xff] %vm1351, %v1323
      %1363 = vst.msk [vmem:[%s334 + $0x58] sm:$0xff] %vm1351, %v1328
      %1364 = vst.msk [vmem:[%s334 + $0x60] sm:$0xff] %vm1351, %v1333
      %1365 = vst.msk [vmem:[%s334 + $0x68] sm:$0xff] %vm1351, %v1338
      %1366 = vst.msk [vmem:[%s334 + $0x70] sm:$0xff] %vm1351, %v1343
      %1367 = vst.msk [vmem:[%s334 + $0x78] sm:$0xff] %vm1351, %v1348
      %s1368 = smul.u32 16, %s20
      %p1369 = scmp.lt.s32.totalorder %s1368, 31
      %s1370 = scalar_select %p1369, %s1368, 31
      %s1371 = smul.addr %s1370, 8
      %s1372 = scalar_lea.vmem %s9, %s1371
      // Predicated region
      $region57: #{pinn_forward.1} parent=55 // pred_check
        %p1373 = pneg %p232
      $region58: #{pinn_forward.1} parent=55 // pred_check_branch
        %1375 = sbr.rel (%p1373) target = $region60
      $region59: #{pinn_forward.1} parent=55 // pred_region
        %s1376 = smul.u32 16, %s20
      $region60: #{pinn_forward.1} parent=55 // pred_fallthru
        _
    $region56: #{pinn_forward.1} parent=5 // pred_fallthru
      _
    %p1377 = scmp.le.s32.totalorder 2, %s15
    // Predicated region
    $region61: #{pinn_forward.1} parent=5 // pred_check
      %p1378 = pneg %p1377
    $region62: #{pinn_forward.1} parent=5 // pred_check_branch
      %1380 = sbr.rel (%p1378) target = $region64
    $region63: #{pinn_forward.1} parent=5 // pred_region
      %s1381 = ssub.s32 %s15, 2
      // Predicated region
      $region65: #{pinn_forward.1} parent=63 // pred_check
        %p1382 = pneg %p238
      $region66: #{pinn_forward.1} parent=63 // pred_check_branch
        %1384 = sbr.rel (%p1382) target = $region68
      $region67: #{pinn_forward.1} parent=63 // pred_region
        %s1385 = smul.u32 16, %s21
        %p1386 = scmp.lt.s32.totalorder %s1385, 31
        %s1387 = scalar_select %p1386, %s1385, 31
        %s1388 = smul.addr %s1387, 8
        %s1389 = scalar_lea.vmem %s9, %s1388
      $region68: #{pinn_forward.1} parent=63 // pred_fallthru
        _
    $region64: #{pinn_forward.1} parent=5 // pred_fallthru
      _
  $region6: #{pinn_forward.1} parent=0 // loop_footer
    %s19 = sadd.s32 1, %s15
  $region7: #{pinn_forward.1} parent=0 // loop_footer_branch
    %14 = sbr.rel target = $region3
  $region8: #{pinn_forward.1} parent=0 // loop_exit
    _

</llo_original>
